<compile_context>
chip_gen: v7x
topology: tpu7x:2x2x1
jax: 0.10.0
libtpu: 0.0.40
codegen_flags: <defaults>
</compile_context>

<pallas_src>
import functools

import jax
import jax.numpy as jnp
from jax import lax
from jax.experimental import pallas as pl
from jax.experimental.pallas import tpu as pltpu


def _poly_cutoff_kernel(x_ref, o_ref, *, p: float, factor: float):
    """out = envelope(x * factor) masked to (x * factor < 1)."""
    # Compute in f32 regardless of I/O dtype: VPU has slack at the HBM bound,
    # keeps the degree-(p+2) polynomial tight, avoids v5e's lack of bf16 VPU.
    x = x_ref[...].astype(jnp.float32) * jnp.float32(factor)

    p_int = int(p)
    if float(p_int) == p:
        # Integer power -> VPU multiply chain (3 muls for p=6); stays off EUP.
        xp = lax.integer_pow(x, p_int)
    else:
        # TODO(synk): non-integer p falls back to the exp/log path (NaN for
        # negative x, matching torch.pow semantics).
        xp = x ** p
    xp1 = xp * x
    xp2 = xp1 * x

    out = (1.0
           - (p + 1.0) * (p + 2.0) / 2.0 * xp
           + p * (p + 2.0) * xp1
           - p * (p + 1.0) / 2.0 * xp2)
    # where(...) instead of out * mask: safe even if xp overflows for large x.
    out = jnp.where(x < 1.0, out, 0.0)
    o_ref[...] = out.astype(o_ref.dtype)


@functools.lru_cache(maxsize=1)
def _tpu_generation() -> str:
    """Best-effort TPU generation detection for block-size / megacore tuning."""
    try:
        kind = jax.devices()[0].device_kind.lower()
    except Exception:
        return "unknown"
    if "v7" in kind:
        return "v7x"
    if "v6" in kind:
        return "v6e"
    if "v5e" in kind or "v5 lite" in kind or "v5lite" in kind:
        return "v5e"
    return "other"


def polynomial_cutoff(x: jax.Array, r_max: float, p: float = 6.0,
                      *, target_block_bytes: int | None = None) -> jax.Array:
    """Pallas implementation of PolynomialCutoff.forward for arbitrary-shape x."""
    assert p >= 2.0
    factor = 1.0 / float(r_max)
    orig_shape = x.shape
    dtype = x.dtype
    total = int(x.size)
    if total == 0:
        return x

    gen = _tpu_generation()
    num_cores = 2 if gen == "v7x" else 1   # v7x shards a "parallel" axis over 2 TCs
    if target_block_bytes is None:
        # Sized against the block-sized f32 temporaries that live in VMEM
        # alongside the 2x-double-buffered I/O tiles (not just I/O alone).
        target_block_bytes = {"v7x": 6 << 20, "v6e": 8 << 20}.get(gen, 4 << 20)

    # ---- Flatten to a lane-dense [rows, L] slab ------------------------------
    flat = x.reshape(-1)
    pad = 0
    L = 128
    for cand in (1024, 512, 256, 128):
        if total % cand == 0:
            L = cand          # no pad, no final slice -> zero extra HBM traffic
            break
    else:
        pad = L - total % L   # worst case 127 elements; only path needing pad+slice
        flat = jnp.pad(flat, (0, pad))
    rows = (total + pad) // L
    x2d = flat.reshape(rows, L)

    # ---- Block height (second-to-last dim: multiple of 8, or full extent) ---
    itemsize = jnp.dtype(dtype).itemsize
    rows_per_block = max(8, (target_block_bytes // (L * 4)) // 8 * 8)  # f32-sized
    if rows_per_block >= rows:
        rows_per_block = rows            # single full-extent block (always legal)
    n_blocks = pl.cdiv(rows, rows_per_block)

    # ---- Megacore balance (v7x only): grid a multiple of the TC count -------
    if num_cores >= 2 and rows >= 2 * 8:
        if n_blocks < num_cores:
            rows_per_block = max(8, ((pl.cdiv(rows, num_cores) + 7) // 8) * 8)
            n_blocks = pl.cdiv(rows, rows_per_block)
        elif n_blocks % num_cores != 0:
            target_blocks = pl.cdiv(n_blocks, num_cores) * num_cores
            cand = max(8, ((pl.cdiv(rows, target_blocks) + 7) // 8) * 8)
            if pl.cdiv(rows, cand) % num_cores == 0:
                rows_per_block = cand
                n_blocks = pl.cdiv(rows, cand)

    # ---- VMEM limit: I/O double buffers + f32 temporaries + headroom ---------
    io_block = rows_per_block * L * itemsize
    tmp_block = rows_per_block * L * 4
    vmem_cap = (56 << 20) if gen == "v7x" else (96 << 20)   # headroom under 64/128 MiB
    vmem_limit = int(min(4 * io_block + 6 * tmp_block + (8 << 20), vmem_cap))

    kernel = functools.partial(_poly_cutoff_kernel, p=float(p), factor=factor)

    out2d = pl.pallas_call(
        kernel,
        out_shape=jax.ShapeDtypeStruct((rows, L), dtype),
        grid_spec=pl.GridSpec(
            grid=(n_blocks,),
            in_specs=[pl.BlockSpec((rows_per_block, L), lambda i: (i, 0))],
            out_specs=pl.BlockSpec((rows_per_block, L), lambda i: (i, 0)),
        ),
        compiler_params=pltpu.CompilerParams(
            dimension_semantics=("parallel",),
            vmem_limit_bytes=vmem_limit,
        ),
        cost_estimate=pl.CostEstimate(
            flops=14 * total,
            transcendentals=0,
            bytes_accessed=2 * total * itemsize,
        ),
    )(x2d)

    out_flat = out2d.reshape(-1)
    if pad:
        out_flat = out_flat[:total]
    return out_flat.reshape(orig_shape)


def _poly_cutoff_ref(x, r_max, p=6.0):
    """Pure-JAX reference mirroring the PyTorch module."""
    x = x * (1.0 / float(r_max))
    p = float(p)
    out = 1.0
    out = out - (p + 1.0) * (p + 2.0) / 2.0 * jnp.power(x, p)
    out = out + p * (p + 2.0) * jnp.power(x, p + 1.0)
    out = out - p * (p + 1.0) / 2.0 * jnp.power(x, p + 2.0)
    return out * (x < 1.0)


if __name__ == "__main__":
    key = jax.random.PRNGKey(0)
    r_max = 5.0
    p = 6.0

    # Aligned shape (2048 elements): exercises the zero-pad / zero-slice path.
    k1, k2 = jax.random.split(key)
    x = jax.random.uniform(k1, (2, 4, 16, 16), dtype=jnp.float32,
                           minval=0.0, maxval=2.0 * r_max)
    out = jax.block_until_ready(polynomial_cutoff(x, r_max=r_max, p=p))
    ref = _poly_cutoff_ref(x, r_max=r_max, p=p)
    assert out.shape == x.shape and out.dtype == x.dtype
    assert jnp.allclose(out, ref, atol=1e-5, rtol=1e-5), "mismatch (aligned)"

    # Ragged shape (105 elements): exercises the minimal-pad + slice fallback.
    x_r = jax.random.uniform(k2, (3, 7, 5), dtype=jnp.float32,
                             minval=0.0, maxval=2.0 * r_max)
    out_r = jax.block_until_ready(polynomial_cutoff(x_r, r_max=r_max, p=p))
    ref_r = _poly_cutoff_ref(x_r, r_max=r_max, p=p)
    assert out_r.shape == x_r.shape and out_r.dtype == x_r.dtype
    assert jnp.allclose(out_r, ref_r, atol=1e-5, rtol=1e-5), "mismatch (ragged)"

    print("KERNEL_OK")
</pallas_src>

<mosaic_0001>
module attributes {stable_mosaic.version = 11 : i64} {
  func.func @_poly_cutoff_kernel(%arg0: i32, %arg1: memref<2x1024xf32, #tpu.memory_space<vmem>>, %arg2: memref<2x1024xf32, #tpu.memory_space<vmem>>) attributes {dimension_semantics = [#tpu.dimension_semantics<parallel>], iteration_bounds = array<i64: 1>, scalar_prefetch = 0 : i64, scratch_operands = 0 : i64, tpu.core_type = #tpu.core_type<tc>, window_params = [{transform_indices = @transform_0, window_bounds = array<i64: 2, 1024>}, {transform_indices = @transform_1, window_bounds = array<i64: 2, 1024>}]} {
    %c0 = arith.constant 0 : index
    %c0_0 = arith.constant 0 : index
    %0 = vector.load %arg1[%c0, %c0_0] : memref<2x1024xf32, #tpu.memory_space<vmem>>, vector<2x1024xf32>
    %cst = arith.constant 2.000000e-01 : f32
    %1 = vector.broadcast %cst : f32 to vector<2x1024xf32>
    %2 = arith.mulf %0, %1 : vector<2x1024xf32>
    %3 = arith.mulf %2, %2 : vector<2x1024xf32>
    %4 = arith.mulf %3, %3 : vector<2x1024xf32>
    %5 = arith.mulf %3, %4 : vector<2x1024xf32>
    %6 = arith.mulf %5, %2 : vector<2x1024xf32>
    %7 = arith.mulf %6, %2 : vector<2x1024xf32>
    %cst_1 = arith.constant 2.800000e+01 : f32
    %8 = vector.broadcast %cst_1 : f32 to vector<2x1024xf32>
    %9 = arith.mulf %8, %5 : vector<2x1024xf32>
    %cst_2 = arith.constant 1.000000e+00 : f32
    %10 = vector.broadcast %cst_2 : f32 to vector<2x1024xf32>
    %11 = arith.subf %10, %9 : vector<2x1024xf32>
    %cst_3 = arith.constant 4.800000e+01 : f32
    %12 = vector.broadcast %cst_3 : f32 to vector<2x1024xf32>
    %13 = arith.mulf %12, %6 : vector<2x1024xf32>
    %14 = arith.addf %11, %13 : vector<2x1024xf32>
    %cst_4 = arith.constant 2.100000e+01 : f32
    %15 = vector.broadcast %cst_4 : f32 to vector<2x1024xf32>
    %16 = arith.mulf %15, %7 : vector<2x1024xf32>
    %17 = arith.subf %14, %16 : vector<2x1024xf32>
    %cst_5 = arith.constant 1.000000e+00 : f32
    %18 = vector.broadcast %cst_5 : f32 to vector<2x1024xf32>
    %19 = arith.cmpf olt, %2, %18 : vector<2x1024xf32>
    %cst_6 = arith.constant 0.000000e+00 : f32
    %20 = vector.broadcast %cst_6 : f32 to vector<2x1024xf32>
    %21 = arith.select %19, %17, %20 : vector<2x1024xi1>, vector<2x1024xf32>
    %c0_7 = arith.constant 0 : index
    %c0_8 = arith.constant 0 : index
    %22 = vector.load %arg2[%c0_7, %c0_8] : memref<2x1024xf32, #tpu.memory_space<vmem>>, vector<2x1024xf32>
    tpu.vector_store %arg2[%c0_7, %c0_8], %21 {strides = array<i32>} : memref<2x1024xf32, #tpu.memory_space<vmem>>, vector<2x1024xf32>,
    return
  }
  func.func @transform_0(%arg0: i32) -> (i32, i32) {
    %c0_i32 = arith.constant 0 : i32
    %c0_i32_0 = arith.constant 0 : i32
    return %arg0, %c0_i32 : i32, i32
  }
  func.func @transform_1(%arg0: i32) -> (i32, i32) {
    %c0_i32 = arith.constant 0 : i32
    %c0_i32_0 = arith.constant 0 : i32
    return %arg0, %c0_i32 : i32, i32
  }
}

</mosaic_0001>

<llo_original>
// kernel: tpu_custom_call.1
$region0: #{tpu_custom_call.1}
  #allocation0 [shape = 'u32[]', space=smem, size = 0x4, offset = 0x4, fixed_abs, tag = 'smem constant byte address 0x4 - core index']
  #allocation1 [shape = 'u32[144,128]{1,0:T(1,128)}', space=vmem, size = 0x12000, scoped, tag = 'internal scratch']
  %s0 = inlined_call_operand.hbm [shape: f32[2,1024], index: 0, kind: input, shape index: {}]
  %s1 = inlined_call_operand.hbm [shape: f32[2,1024], index: 1, kind: output, shape index: {}]
  %s2 = sld [smem:[#allocation0]]
  $region18: #{tpu_custom_call.1} parent=0
    _
  %s4 = ssub.s32 1, %s2
  %s5 = scalar_select 0, %s4, %s2
  $region1: #{tpu_custom_call.1} parent=0
    #allocation2 [shape = 'u8[8192]{0}', space=vmem, size = 0x2000, scoped, tag = 'input window, operand 0, single buffered']
    #allocation3 [shape = 's32[1]{0}', space=sflag, size = 0x4, scoped, tag = 'scoped memory for tpu_custom_call.1']
    #allocation4 [shape = 's32[1]{0}', space=sflag, size = 0x4, scoped, tag = 'scoped memory for tpu_custom_call.1']
    #allocation5 [shape = 'u8[8192]{0}', space=vmem, size = 0x2000, scoped, tag = 'output window, operand 0, single buffered']
    %6 = vsyncpa [#allocation3], 0
    %7 = vsyncpa [#allocation4], 0
    // Predicated region
    $region2: #{tpu_custom_call.1} parent=1 // pred_check
      _
    $region3: #{tpu_custom_call.1} parent=1 // pred_check_branch
      %9 = sbr.rel (0) target = $region5
    $region4: #{tpu_custom_call.1} parent=1 // pred_region
      %s11 = ssub.s32 256, 256
      %12 = vsyncadd [#allocation3], %s11
      %s14 = sshll.u32 [#allocation2], 4
      %s15 = int_to_ptr.vmem [resolvable:$true] %s14
      %17 = dma.hbm_to_vmem [thread:$0]  %s0, 256, %s15, [#allocation3]
    $region5: #{tpu_custom_call.1} parent=1 // pred_fallthru
      _
    // Predicated region
    $region6: #{tpu_custom_call.1} parent=1 // pred_check
      _
    $region7: #{tpu_custom_call.1} parent=1 // pred_check_branch
      %19 = sbr.rel (0) target = $region9
    $region8: #{tpu_custom_call.1} parent=1 // pred_region
      %20 = dma.done [#allocation3], 256
    $region9: #{tpu_custom_call.1} parent=1 // pred_fallthru
      _
    %v21 = vld [vmem:[#allocation2] sm:$0xff]
    %v22 = vld [vmem:[#allocation2 + $0x8] sm:$0xff]
    %v23 = vmul.f32 %v21, 0.2
    %v24 = vmul.f32 %v22, 0.2
    %v25 = vmul.f32 %v23, %v23
    %v26 = vmul.f32 %v24, %v24
    %v27 = vmul.f32 %v25, %v25
    %v28 = vmul.f32 %v26, %v26
    %v29 = vmul.f32 %v25, %v27
    %v30 = vmul.f32 %v26, %v28
    %v31 = vmul.f32 %v29, %v23
    %v32 = vmul.f32 %v30, %v24
    %v33 = vmul.f32 %v31, %v23
    %v34 = vmul.f32 %v32, %v24
    %v35 = vmul.f32 %v29, 28.0
    %v36 = vmul.f32 %v30, 28.0
    %v37 = vsub.f32 1.0, %v35
    %v38 = vsub.f32 1.0, %v36
    %v39 = vmul.f32 %v31, 48.0
    %v40 = vmul.f32 %v32, 48.0
    %v41 = vadd.f32 %v37, %v39
    %v42 = vadd.f32 %v38, %v40
    %v43 = vmul.f32 %v33, 21.0
    %v44 = vmul.f32 %v34, 21.0
    %v45 = vsub.f32 %v41, %v43
    %v46 = vsub.f32 %v42, %v44
    %vm47 = vcmp.lt.f32.partialorder %v23, 1.0
    %vm48 = vcmp.lt.f32.partialorder %v24, 1.0
    %v49 = vsel %vm47, %v45, 0.0
    %v50 = vsel %vm48, %v46, 0.0
    %51 = vst [vmem:[#allocation5] sm:$0xff] %v49
    %52 = vst [vmem:[#allocation5 + $0x8] sm:$0xff] %v50
    // Predicated region
    $region10: #{tpu_custom_call.1} parent=1 // pred_check
      _
    $region11: #{tpu_custom_call.1} parent=1 // pred_check_branch
      %54 = sbr.rel (0) target = $region13
    $region12: #{tpu_custom_call.1} parent=1 // pred_region
      %s56 = ssub.s32 256, 256
      %57 = vsyncadd [#allocation4], %s56
      %s59 = sshll.u32 [#allocation5], 4
      %s60 = int_to_ptr.vmem [resolvable:$true] %s59
      %62 = dma.vmem_to_hbm [thread:$0]  %s60, 256, %s1, [#allocation4]
    $region13: #{tpu_custom_call.1} parent=1 // pred_fallthru
      _
    // Predicated region
    $region14: #{tpu_custom_call.1} parent=1 // pred_check
      _
    $region15: #{tpu_custom_call.1} parent=1 // pred_check_branch
      %64 = sbr.rel (0) target = $region17
    $region16: #{tpu_custom_call.1} parent=1 // pred_region
      %65 = dma.done [#allocation4], 256
    $region17: #{tpu_custom_call.1} parent=1 // pred_fallthru
      _
    %66 = vsyncpa [#allocation3], 1
    %67 = vsyncpa [#allocation4], 1

</llo_original>
